<compile_context>
chip_gen: v7x
topology: tpu7x:2x2x1
jax: 0.10.0
libtpu: 0.0.40
codegen_flags: <defaults>
</compile_context>

<pallas_src>
import functools
import math

import jax
import jax.numpy as jnp
from jax import lax
from jax.experimental import pallas as pl
from jax.experimental.pallas import tpu as pltpu

EPS = 1e-5                                   # nn.LayerNorm default eps
VMEM_LIMIT_BYTES = 48 * 1024 * 1024          # explicit scoped-VMEM budget

# attn_type flags (mirrors ViT_Attn enum)
ATTN_EXPLORATIVE = 0
ATTN_EXPLOITATIVE = 1
ATTN_CLS = 2


# ---------------------------------------------------------------------------
# in-kernel helpers
# ---------------------------------------------------------------------------
def _layernorm(x, g, b):
    mu = jnp.mean(x, axis=-1, keepdims=True)
    xc = x - mu
    var = jnp.mean(xc * xc, axis=-1, keepdims=True)
    return xc * lax.rsqrt(var + EPS) * g + b


def _gelu_exact(x):
    # nn.GELU default (approximate='none'): 0.5 * x * (1 + erf(x / sqrt(2)))
    return 0.5 * x * (1.0 + lax.erf(x * (1.0 / math.sqrt(2.0))))


# ---------------------------------------------------------------------------
# Pallas kernels
# ---------------------------------------------------------------------------
def layer_kernel(x_ref, ag_ref, ab_ref, wqkv_ref, wo_ref, bo_ref,
                 fg_ref, fb_ref, w1_ref, b1_ref, w2_ref, b2_ref, o_ref,
                 *, heads, dim_head):
    """One transformer layer (attention + MLP, both pre-LN with residual) for a
    single batch element; the activation block never leaves VMEM in between."""
    cdt = wqkv_ref.dtype                          # MXU compute dtype (bf16)
    x = x_ref[0].astype(jnp.float32)              # (N, D) residual stream, f32
    inner = heads * dim_head
    scale = dim_head ** (-0.5)

    # ---------------- attention sub-block ----------------
    xn = _layernorm(x, ag_ref[0], ab_ref[0])
    qkv = jnp.dot(xn.astype(cdt), wqkv_ref[...],
                  preferred_element_type=jnp.float32).astype(cdt)  # (N, 3*inner)

    # Split heads once into a (heads, N, dim_head) batch layout so QK^T and
    # attn@V are head-batched MXU contractions (no per-head matmul loop).
    def to_heads(base):
        return jnp.stack(
            [qkv[:, base + h * dim_head: base + (h + 1) * dim_head]
             for h in range(heads)], axis=0)

    q3 = to_heads(0) * scale                      # scale folded into q
    k3 = to_heads(inner)
    v3 = to_heads(2 * inner)

    dots = jnp.einsum('hnd,hmd->hnm', q3, k3,
                      preferred_element_type=jnp.float32)          # (h, N, N)
    m = jnp.max(dots, axis=-1, keepdims=True)
    e = jnp.exp(dots - m)
    s = jnp.sum(e, axis=-1, keepdims=True)
    p = (e * pl.reciprocal(s, approx=True)).astype(cdt)            # softmax

    out3 = jnp.einsum('hnm,hmd->hnd', p, v3,
                      preferred_element_type=jnp.float32)          # (h, N, d)
    out = jnp.concatenate([out3[h] for h in range(heads)], axis=-1)  # (N, inner)

    # single full-width output projection, bias added once afterwards
    proj = jnp.dot(out.astype(cdt), wo_ref[...],
                   preferred_element_type=jnp.float32) + bo_ref[0]
    x = x + proj                                                   # residual

    # ---------------- MLP sub-block ----------------
    xn2 = _layernorm(x, fg_ref[0], fb_ref[0])
    h1 = jnp.dot(xn2.astype(cdt), w1_ref[...],
                 preferred_element_type=jnp.float32) + b1_ref[0]
    h1 = _gelu_exact(h1)
    y = jnp.dot(h1.astype(cdt), w2_ref[...],
                preferred_element_type=jnp.float32) + b2_ref[0]

    o_ref[0] = (x + y).astype(o_ref.dtype)                         # residual


def patch_embed_kernel(x_ref, g1_ref, b1_ref, w_ref, b_ref, g2_ref, b2_ref,
                       o_ref):
    """LayerNorm(patch_dim) -> Linear(patch_dim, dim) -> LayerNorm(dim)."""
    x = x_ref[...].astype(jnp.float32)            # (rows, patch_dim)
    xn = _layernorm(x, g1_ref[0], b1_ref[0])
    y = jnp.dot(xn.astype(w_ref.dtype), w_ref[...],
                preferred_element_type=jnp.float32) + b_ref[0]
    o_ref[...] = _layernorm(y, g2_ref[0], b2_ref[0]).astype(o_ref.dtype)


def layernorm_kernel(x_ref, g_ref, b_ref, o_ref):
    o_ref[...] = _layernorm(x_ref[...].astype(jnp.float32),
                            g_ref[0], b_ref[0]).astype(o_ref.dtype)


def head_kernel(x_ref, w_ref, b_ref, o_ref):
    y = jnp.dot(x_ref[...].astype(w_ref.dtype), w_ref[...],
                preferred_element_type=jnp.float32) + b_ref[0]
    o_ref[...] = y.astype(o_ref.dtype)


# ---------------------------------------------------------------------------
# pallas_call wrappers
# ---------------------------------------------------------------------------
def _rep_spec(a):
    """Grid-invariant (replicated) full-array BlockSpec for weights/biases."""
    nd = a.ndim
    return pl.BlockSpec(a.shape, lambda i, _nd=nd: (0,) * _nd)


def _row_tile(rows):
    for t in (512, 256, 128, 64, 32, 16, 8):
        if rows % t == 0:
            return t
    return rows


def transformer_layer(x, layer_params, *, heads, dim_head):
    B, N, D = x.shape
    a, f = layer_params["attn"], layer_params["ff"]
    params = (a["g"], a["b"], a["wqkv"], a["wo"], a["bo"],
              f["g"], f["b"], f["w1"], f["b1"], f["w2"], f["b2"])
    kern = functools.partial(layer_kernel, heads=heads, dim_head=dim_head)
    in_specs = [pl.BlockSpec((1, N, D), lambda i: (i, 0, 0))]
    in_specs += [_rep_spec(p) for p in params]
    return pl.pallas_call(
        kern,
        out_shape=jax.ShapeDtypeStruct((B, N, D), x.dtype),
        grid_spec=pltpu.PrefetchScalarGridSpec(
            num_scalar_prefetch=0,
            grid=(B,),
            in_specs=in_specs,
            out_specs=pl.BlockSpec((1, N, D), lambda i: (i, 0, 0)),
        ),
        compiler_params=pltpu.CompilerParams(
            dimension_semantics=("parallel",),
            vmem_limit_bytes=VMEM_LIMIT_BYTES),
    )(x, *params)


def patch_embed(patches, p):
    R, PD = patches.shape
    D = p["w"].shape[1]
    tile = _row_tile(R)
    return pl.pallas_call(
        patch_embed_kernel,
        out_shape=jax.ShapeDtypeStruct((R, D), jnp.float32),
        grid_spec=pltpu.PrefetchScalarGridSpec(
            num_scalar_prefetch=0,
            grid=(R // tile,),
            in_specs=[pl.BlockSpec((tile, PD), lambda i: (i, 0)),
                      _rep_spec(p["ln1_g"]), _rep_spec(p["ln1_b"]),
                      _rep_spec(p["w"]), _rep_spec(p["b"]),
                      _rep_spec(p["ln2_g"]), _rep_spec(p["ln2_b"])],
            out_specs=pl.BlockSpec((tile, D), lambda i: (i, 0)),
        ),
        compiler_params=pltpu.CompilerParams(
            dimension_semantics=("parallel",),
            vmem_limit_bytes=VMEM_LIMIT_BYTES),
    )(patches, p["ln1_g"], p["ln1_b"], p["w"], p["b"], p["ln2_g"], p["ln2_b"])


def final_layernorm(x, p):
    B, N, D = x.shape
    rows = B * N
    tile = _row_tile(rows)
    xf = x.reshape(rows, D)
    out = pl.pallas_call(
        layernorm_kernel,
        out_shape=jax.ShapeDtypeStruct((rows, D), x.dtype),
        grid_spec=pltpu.PrefetchScalarGridSpec(
            num_scalar_prefetch=0,
            grid=(rows // tile,),
            in_specs=[pl.BlockSpec((tile, D), lambda i: (i, 0)),
                      _rep_spec(p["g"]), _rep_spec(p["b"])],
            out_specs=pl.BlockSpec((tile, D), lambda i: (i, 0)),
        ),
        compiler_params=pltpu.CompilerParams(
            dimension_semantics=("parallel",),
            vmem_limit_bytes=VMEM_LIMIT_BYTES),
    )(xf, p["g"], p["b"])
    return out.reshape(B, N, D)


def mlp_head(x, p):
    B, D = x.shape
    C = p["w"].shape[1]
    return pl.pallas_call(
        head_kernel,
        out_shape=jax.ShapeDtypeStruct((B, C), jnp.float32),
        grid_spec=pltpu.PrefetchScalarGridSpec(
            num_scalar_prefetch=0,
            grid=(1,),
            in_specs=[pl.BlockSpec((B, D), lambda i: (0, 0)),
                      _rep_spec(p["w"]), _rep_spec(p["b"])],
            out_specs=pl.BlockSpec((B, C), lambda i: (0, 0)),
        ),
        compiler_params=pltpu.CompilerParams(
            dimension_semantics=("arbitrary",),
            vmem_limit_bytes=VMEM_LIMIT_BYTES),
    )(x, p["w"], p["b"])


def transformer_forward(x, params, *, heads, dim_head):
    for layer in params["layers"]:
        x = transformer_layer(x, layer, heads=heads, dim_head=dim_head)
    return final_layernorm(x, params["final_norm"])


# ---------------------------------------------------------------------------
# full ViT forward (patch rearrange / token / pos-embed / pooling are thin JAX
# glue around the Pallas kernels)
# ---------------------------------------------------------------------------
def extract_patches(img, patch_size):
    # 'b c (h p1) (w p2) -> b (h w) (p1 p2 c)'
    B, C, H, W = img.shape
    p = patch_size
    h, w = H // p, W // p
    x = img.reshape(B, C, h, p, w, p)
    x = x.transpose(0, 2, 4, 3, 5, 1)             # b h w p1 p2 c
    return x.reshape(B, h * w, p * p * C)


def vit_forward(img, params, *, patch_size, heads, dim_head,
                attn_type=ATTN_EXPLOITATIVE, pool="cls"):
    B = img.shape[0]
    patches = extract_patches(img, patch_size)    # (B, n, patch_dim)
    _, n, pd = patches.shape
    x = patch_embed(patches.reshape(B * n, pd), params["patch"])
    D = x.shape[-1]
    x = x.reshape(B, n, D)

    # Reachable branch of the reference forward (use_explorativeAttn=True,
    # EXPLOITATIVE_ATTN) prepends the exploration token; the other token is
    # used for the remaining attn types.
    tok = (params["exploration_token"] if attn_type == ATTN_EXPLOITATIVE
           else params["exploitation_token"])
    x = jnp.concatenate([jnp.broadcast_to(tok, (B, 1, D)), x], axis=1)
    x = x + params["pos_embedding"][:, :n + 1]

    x = transformer_forward(x, params, heads=heads, dim_head=dim_head)
    x = x.mean(axis=1) if pool == "mean" else x[:, 0]   # cls pooling
    return mlp_head(x, params["head"])


# ---------------------------------------------------------------------------
# deterministic parameter init (matmul weights in bf16, LN/bias in f32)
# ---------------------------------------------------------------------------
def init_params(key, *, image_size, patch_size, channels, num_classes,
                dim, depth, heads, dim_head, mlp_dim, w_dtype=jnp.bfloat16):
    inner = heads * dim_head
    num_patches = (image_size // patch_size) ** 2
    patch_dim = channels * patch_size * patch_size

    def nrm(k, shape, scale=0.02, dtype=jnp.float32):
        return (scale * jax.random.normal(k, shape, jnp.float32)).astype(dtype)

    key, kpw, kpb, kpos, kt1, kt2, khw = jax.random.split(key, 7)
    params = dict(
        patch=dict(
            ln1_g=jnp.ones((1, patch_dim), jnp.float32),
            ln1_b=jnp.zeros((1, patch_dim), jnp.float32),
            w=nrm(kpw, (patch_dim, dim), dtype=w_dtype),
            b=nrm(kpb, (1, dim)),
            ln2_g=jnp.ones((1, dim), jnp.float32),
            ln2_b=jnp.zeros((1, dim), jnp.float32),
        ),
        pos_embedding=nrm(kpos, (1, num_patches + 1, dim), scale=1.0),
        exploration_token=nrm(kt1, (1, 1, dim), scale=1.0),
        exploitation_token=nrm(kt2, (1, 1, dim), scale=1.0),
        head=dict(w=nrm(khw, (dim, num_classes), dtype=w_dtype),
                  b=jnp.zeros((1, num_classes), jnp.float32)),
        layers=[],
        final_norm=dict(g=jnp.ones((1, dim), jnp.float32),
                        b=jnp.zeros((1, dim), jnp.float32)),
    )
    for _ in range(depth):
        key, k1, k2, k3, k4, k5, k6 = jax.random.split(key, 7)
        attn = dict(g=jnp.ones((1, dim), jnp.float32),
                    b=jnp.zeros((1, dim), jnp.float32),
                    wqkv=nrm(k1, (dim, 3 * inner), dtype=w_dtype),
                    wo=nrm(k2, (inner, dim), dtype=w_dtype),
                    bo=nrm(k3, (1, dim)))
        ff = dict(g=jnp.ones((1, dim), jnp.float32),
                  b=jnp.zeros((1, dim), jnp.float32),
                  w1=nrm(k4, (dim, mlp_dim), dtype=w_dtype),
                  b1=nrm(k5, (1, mlp_dim)),
                  w2=nrm(k6, (mlp_dim, dim), dtype=w_dtype),
                  b2=jnp.zeros((1, dim), jnp.float32))
        params["layers"].append(dict(attn=attn, ff=ff))
    return params


# ---------------------------------------------------------------------------
# pure-JAX f32 reference (same math, bf16 weights upcast) for a sanity check
# ---------------------------------------------------------------------------
def _ref_forward(img, params, *, patch_size, heads, dim_head,
                 attn_type=ATTN_EXPLOITATIVE):
    f32 = lambda t: t.astype(jnp.float32)

    def ln(x, g, b):
        mu = x.mean(-1, keepdims=True)
        var = ((x - mu) ** 2).mean(-1, keepdims=True)
        return (x - mu) / jnp.sqrt(var + EPS) * g + b

    patches = extract_patches(img, patch_size)
    pp = params["patch"]
    x = ln(patches, pp["ln1_g"][0], pp["ln1_b"][0])
    x = x @ f32(pp["w"]) + pp["b"][0]
    x = ln(x, pp["ln2_g"][0], pp["ln2_b"][0])

    B, n, D = x.shape
    tok = (params["exploration_token"] if attn_type == ATTN_EXPLOITATIVE
           else params["exploitation_token"])
    x = jnp.concatenate([jnp.broadcast_to(tok, (B, 1, D)), x], axis=1)
    x = x + params["pos_embedding"][:, :n + 1]

    inner = heads * dim_head
    for layer in params["layers"]:
        a = layer["attn"]
        xn = ln(x, a["g"][0], a["b"][0])
        qkv = xn @ f32(a["wqkv"])
        q, k, v = jnp.split(qkv, 3, axis=-1)

        def split_heads(t):
            b_, m_, _ = t.shape
            return t.reshape(b_, m_, heads, dim_head).transpose(0, 2, 1, 3)

        q, k, v = map(split_heads, (q, k, v))
        dots = jnp.einsum("bhnd,bhmd->bhnm", q, k) * dim_head ** -0.5
        attn = jax.nn.softmax(dots, axis=-1)
        out = jnp.einsum("bhnm,bhmd->bhnd", attn, v)
        out = out.transpose(0, 2, 1, 3).reshape(x.shape[0], x.shape[1], inner)
        x = out @ f32(a["wo"]) + a["bo"][0] + x

        ff = layer["ff"]
        xn = ln(x, ff["g"][0], ff["b"][0])
        h = xn @ f32(ff["w1"]) + ff["b1"][0]
        h = 0.5 * h * (1.0 + lax.erf(h / math.sqrt(2.0)))
        x = h @ f32(ff["w2"]) + ff["b2"][0] + x

    fn = params["final_norm"]
    x = ln(x, fn["g"][0], fn["b"][0])
    x = x[:, 0]
    return x @ f32(params["head"]["w"]) + params["head"]["b"][0]


# ---------------------------------------------------------------------------
if __name__ == "__main__":
    # small shapes consistent with the module's forward
    B = 2
    image_size, patch_size, channels = 16, 4, 3
    num_classes = 10
    dim, depth, heads, dim_head, mlp_dim = 128, 2, 4, 32, 256

    key = jax.random.PRNGKey(0)
    kimg, kp = jax.random.split(key)
    img = jax.random.normal(kimg, (B, channels, image_size, image_size),
                            jnp.float32)
    params = init_params(kp, image_size=image_size, patch_size=patch_size,
                         channels=channels, num_classes=num_classes, dim=dim,
                         depth=depth, heads=heads, dim_head=dim_head,
                         mlp_dim=mlp_dim)

    out = vit_forward(img, params, patch_size=patch_size, heads=heads,
                      dim_head=dim_head, attn_type=ATTN_EXPLOITATIVE)
    out = jax.block_until_ready(out)

    ref = _ref_forward(img, params, patch_size=patch_size, heads=heads,
                       dim_head=dim_head, attn_type=ATTN_EXPLOITATIVE)
    assert out.shape == (B, num_classes)
    max_err = float(jnp.max(jnp.abs(out - ref)))
    assert jnp.allclose(out, ref, atol=3e-2, rtol=3e-2), (
        f"mismatch vs reference (max abs err {max_err:.4e})")

    print("KERNEL_OK")
</pallas_src>

<mosaic_0001>
module attributes {stable_mosaic.version = 11 : i64} {
  func.func @patch_embed_kernel(%arg0: i32, %arg1: memref<32x48xf32, #tpu.memory_space<vmem>>, %arg2: memref<1x48xf32, #tpu.memory_space<vmem>>, %arg3: memref<1x48xf32, #tpu.memory_space<vmem>>, %arg4: memref<48x128xbf16, #tpu.memory_space<vmem>>, %arg5: memref<1x128xf32, #tpu.memory_space<vmem>>, %arg6: memref<1x128xf32, #tpu.memory_space<vmem>>, %arg7: memref<1x128xf32, #tpu.memory_space<vmem>>, %arg8: memref<32x128xf32, #tpu.memory_space<vmem>>) attributes {dimension_semantics = [#tpu.dimension_semantics<parallel>], iteration_bounds = array<i64: 1>, scalar_prefetch = 0 : i64, scratch_operands = 0 : i64, tpu.core_type = #tpu.core_type<tc>, window_params = [{transform_indices = @transform_0, window_bounds = array<i64: 32, 48>}, {pipeline_mode = #tpu.pipeline_mode<synchronous>, transform_indices = @transform_1, window_bounds = array<i64: 1, 48>}, {pipeline_mode = #tpu.pipeline_mode<synchronous>, transform_indices = @transform_2, window_bounds = array<i64: 1, 48>}, {pipeline_mode = #tpu.pipeline_mode<synchronous>, transform_indices = @transform_3, window_bounds = array<i64: 48, 128>}, {pipeline_mode = #tpu.pipeline_mode<synchronous>, transform_indices = @transform_4, window_bounds = array<i64: 1, 128>}, {pipeline_mode = #tpu.pipeline_mode<synchronous>, transform_indices = @transform_5, window_bounds = array<i64: 1, 128>}, {pipeline_mode = #tpu.pipeline_mode<synchronous>, transform_indices = @transform_6, window_bounds = array<i64: 1, 128>}, {transform_indices = @transform_7, window_bounds = array<i64: 32, 128>}]} {
    %c0 = arith.constant 0 : index
    %c0_0 = arith.constant 0 : index
    %0 = vector.load %arg1[%c0, %c0_0] : memref<32x48xf32, #tpu.memory_space<vmem>>, vector<32x48xf32>
    %c0_1 = arith.constant 0 : index
    %c0_2 = arith.constant 0 : index
    %1 = vector.load %arg2[%c0_1, %c0_2] : memref<1x48xf32, #tpu.memory_space<vmem>>, vector<1x48xf32>
    %2 = vector.shape_cast %1 : vector<1x48xf32> to vector<48xf32>
    %c0_3 = arith.constant 0 : index
    %c0_4 = arith.constant 0 : index
    %3 = vector.load %arg3[%c0_3, %c0_4] : memref<1x48xf32, #tpu.memory_space<vmem>>, vector<1x48xf32>
    %4 = vector.shape_cast %3 : vector<1x48xf32> to vector<48xf32>
    %cst = arith.constant dense<0.000000e+00> : vector<32xf32>
    %5 = vector.multi_reduction <add>, %0, %cst [1] : vector<32x48xf32> to vector<32xf32>
    %6 = vector.shape_cast %5 : vector<32xf32> to vector<32x1xf32>
    %cst_5 = arith.constant 4.800000e+01 : f32
    %7 = vector.broadcast %cst_5 : f32 to vector<32x1xf32>
    %8 = arith.divf %6, %7 : vector<32x1xf32>
    %9 = vector.broadcast %8 : vector<32x1xf32> to vector<32x48xf32>
    %10 = arith.subf %0, %9 : vector<32x48xf32>
    %11 = arith.mulf %10, %10 : vector<32x48xf32>
    %cst_6 = arith.constant dense<0.000000e+00> : vector<32xf32>
    %12 = vector.multi_reduction <add>, %11, %cst_6 [1] : vector<32x48xf32> to vector<32xf32>
    %13 = vector.shape_cast %12 : vector<32xf32> to vector<32x1xf32>
    %cst_7 = arith.constant 4.800000e+01 : f32
    %14 = vector.broadcast %cst_7 : f32 to vector<32x1xf32>
    %15 = arith.divf %13, %14 : vector<32x1xf32>
    %cst_8 = arith.constant 9.99999974E-6 : f32
    %16 = vector.broadcast %cst_8 : f32 to vector<32x1xf32>
    %17 = arith.addf %15, %16 : vector<32x1xf32>
    %18 = math.rsqrt %17 : vector<32x1xf32>
    %19 = vector.broadcast %18 : vector<32x1xf32> to vector<32x48xf32>
    %20 = arith.mulf %10, %19 : vector<32x48xf32>
    %21 = vector.shape_cast %2 : vector<48xf32> to vector<1x48xf32>
    %22 = vector.broadcast %21 : vector<1x48xf32> to vector<32x48xf32>
    %23 = arith.mulf %20, %22 : vector<32x48xf32>
    %24 = vector.shape_cast %4 : vector<48xf32> to vector<1x48xf32>
    %25 = vector.broadcast %24 : vector<1x48xf32> to vector<32x48xf32>
    %26 = arith.addf %23, %25 : vector<32x48xf32>
    %27 = arith.truncf %26 : vector<32x48xf32> to vector<32x48xbf16>
    %c0_9 = arith.constant 0 : index
    %c0_10 = arith.constant 0 : index
    %28 = vector.load %arg4[%c0_9, %c0_10] : memref<48x128xbf16, #tpu.memory_space<vmem>>, vector<48x128xbf16>
    %cst_11 = arith.constant dense<0.000000e+00> : vector<32x128xf32>
    %29 = tpu.matmul %27, %28, %cst_11 {dimension_numbers = #tpu.dot_dimension_numbers<[1], [0], [0], [1], [0, 0, 1, 1], [], []>} : vector<32x48xbf16>, vector<48x128xbf16>, vector<32x128xf32> -> vector<32x128xf32>
    %c0_12 = arith.constant 0 : index
    %c0_13 = arith.constant 0 : index
    %30 = vector.load %arg5[%c0_12, %c0_13] : memref<1x128xf32, #tpu.memory_space<vmem>>, vector<1x128xf32>
    %31 = vector.shape_cast %30 : vector<1x128xf32> to vector<128xf32>
    %32 = vector.shape_cast %31 : vector<128xf32> to vector<1x128xf32>
    %33 = vector.broadcast %32 : vector<1x128xf32> to vector<32x128xf32>
    %34 = arith.addf %29, %33 : vector<32x128xf32>
    %c0_14 = arith.constant 0 : index
    %c0_15 = arith.constant 0 : index
    %35 = vector.load %arg6[%c0_14, %c0_15] : memref<1x128xf32, #tpu.memory_space<vmem>>, vector<1x128xf32>
    %36 = vector.shape_cast %35 : vector<1x128xf32> to vector<128xf32>
    %c0_16 = arith.constant 0 : index
    %c0_17 = arith.constant 0 : index
    %37 = vector.load %arg7[%c0_16, %c0_17] : memref<1x128xf32, #tpu.memory_space<vmem>>, vector<1x128xf32>
    %38 = vector.shape_cast %37 : vector<1x128xf32> to vector<128xf32>
    %cst_18 = arith.constant dense<0.000000e+00> : vector<32xf32>
    %39 = vector.multi_reduction <add>, %34, %cst_18 [1] : vector<32x128xf32> to vector<32xf32>
    %40 = vector.shape_cast %39 : vector<32xf32> to vector<32x1xf32>
    %cst_19 = arith.constant 1.280000e+02 : f32
    %41 = vector.broadcast %cst_19 : f32 to vector<32x1xf32>
    %42 = arith.divf %40, %41 : vector<32x1xf32>
    %43 = vector.broadcast %42 : vector<32x1xf32> to vector<32x128xf32>
    %44 = arith.subf %34, %43 : vector<32x128xf32>
    %45 = arith.mulf %44, %44 : vector<32x128xf32>
    %cst_20 = arith.constant dense<0.000000e+00> : vector<32xf32>
    %46 = vector.multi_reduction <add>, %45, %cst_20 [1] : vector<32x128xf32> to vector<32xf32>
    %47 = vector.shape_cast %46 : vector<32xf32> to vector<32x1xf32>
    %cst_21 = arith.constant 1.280000e+02 : f32
    %48 = vector.broadcast %cst_21 : f32 to vector<32x1xf32>
    %49 = arith.divf %47, %48 : vector<32x1xf32>
    %cst_22 = arith.constant 9.99999974E-6 : f32
    %50 = vector.broadcast %cst_22 : f32 to vector<32x1xf32>
    %51 = arith.addf %49, %50 : vector<32x1xf32>
    %52 = math.rsqrt %51 : vector<32x1xf32>
    %53 = vector.broadcast %52 : vector<32x1xf32> to vector<32x128xf32>
    %54 = arith.mulf %44, %53 : vector<32x128xf32>
    %55 = vector.shape_cast %36 : vector<128xf32> to vector<1x128xf32>
    %56 = vector.broadcast %55 : vector<1x128xf32> to vector<32x128xf32>
    %57 = arith.mulf %54, %56 : vector<32x128xf32>
    %58 = vector.shape_cast %38 : vector<128xf32> to vector<1x128xf32>
    %59 = vector.broadcast %58 : vector<1x128xf32> to vector<32x128xf32>
    %60 = arith.addf %57, %59 : vector<32x128xf32>
    %c0_23 = arith.constant 0 : index
    %c0_24 = arith.constant 0 : index
    %61 = vector.load %arg8[%c0_23, %c0_24] : memref<32x128xf32, #tpu.memory_space<vmem>>, vector<32x128xf32>
    tpu.vector_store %arg8[%c0_23, %c0_24], %60 {strides = array<i32>} : memref<32x128xf32, #tpu.memory_space<vmem>>, vector<32x128xf32>,
    return
  }
  func.func @transform_0(%arg0: i32) -> (i32, i32) {
    %c0_i32 = arith.constant 0 : i32
    %c0_i32_0 = arith.constant 0 : i32
    return %arg0, %c0_i32 : i32, i32
  }
  func.func @transform_1(%arg0: i32) -> (i32, i32) {
    %c0_i32 = arith.constant 0 : i32
    %c0_i32_0 = arith.constant 0 : i32
    %c0_i32_1 = arith.constant 0 : i32
    return %c0_i32, %c0_i32_0 : i32, i32
  }
  func.func @transform_2(%arg0: i32) -> (i32, i32) {
    %c0_i32 = arith.constant 0 : i32
    %c0_i32_0 = arith.constant 0 : i32
    %c0_i32_1 = arith.constant 0 : i32
    return %c0_i32, %c0_i32_0 : i32, i32
  }
  func.func @transform_3(%arg0: i32) -> (i32, i32) {
    %c0_i32 = arith.constant 0 : i32
    %c0_i32_0 = arith.constant 0 : i32
    %c0_i32_1 = arith.constant 0 : i32
    return %c0_i32, %c0_i32_0 : i32, i32
  }
  func.func @transform_4(%arg0: i32) -> (i32, i32) {
    %c0_i32 = arith.constant 0 : i32
    %c0_i32_0 = arith.constant 0 : i32
    %c0_i32_1 = arith.constant 0 : i32
    return %c0_i32, %c0_i32_0 : i32, i32
  }
  func.func @transform_5(%arg0: i32) -> (i32, i32) {
    %c0_i32 = arith.constant 0 : i32
    %c0_i32_0 = arith.constant 0 : i32
    %c0_i32_1 = arith.constant 0 : i32
    return %c0_i32, %c0_i32_0 : i32, i32
  }
  func.func @transform_6(%arg0: i32) -> (i32, i32) {
    %c0_i32 = arith.constant 0 : i32
    %c0_i32_0 = arith.constant 0 : i32
    %c0_i32_1 = arith.constant 0 : i32
    return %c0_i32, %c0_i32_0 : i32, i32
  }
  func.func @transform_7(%arg0: i32) -> (i32, i32) {
    %c0_i32 = arith.constant 0 : i32
    %c0_i32_0 = arith.constant 0 : i32
    return %arg0, %c0_i32 : i32, i32
  }
}

</mosaic_0001>

<llo_original>
// kernel: tpu_custom_call.1
$region0: #{tpu_custom_call.1}
  #allocation0 [shape = 'u32[]', space=smem, size = 0x4, offset = 0x4, fixed_abs, tag = 'smem constant byte address 0x4 - core index']
  #allocation1 [shape = 'u32[144,128]{1,0:T(1,128)}', space=vmem, size = 0x12000, scoped, tag = 'internal scratch']
  %s0 = inlined_call_operand.hbm [shape: f32[32,48], index: 0, kind: input, shape index: {}]
  %s1 = inlined_call_operand.vmem [shape: f32[1,48], index: 1, kind: input, shape index: {}]
  %s2 = inlined_call_operand.vmem [shape: f32[1,48], index: 2, kind: input, shape index: {}]
  %s3 = inlined_call_operand.hbm [shape: bf16[48,128], index: 3, kind: input, shape index: {}]
  %s4 = inlined_call_operand.vmem [shape: f32[1,128], index: 4, kind: input, shape index: {}]
  %s5 = inlined_call_operand.vmem [shape: f32[1,128], index: 5, kind: input, shape index: {}]
  %s6 = inlined_call_operand.vmem [shape: f32[1,128], index: 6, kind: input, shape index: {}]
  %s7 = inlined_call_operand.hbm [shape: f32[32,128], index: 7, kind: output, shape index: {}]
  %s8 = sld [smem:[#allocation0]]
  $region46: #{tpu_custom_call.1} parent=0
    _
  %s10 = ssub.s32 1, %s8
  %s11 = scalar_select 0, %s10, %s8
  $region1: #{tpu_custom_call.1} parent=0
    #allocation2 [shape = 'u8[16384]{0}', space=vmem, size = 0x4000, scoped, tag = 'input window, operand 0, single buffered']
    #allocation3 [shape = 's32[1]{0}', space=sflag, size = 0x4, scoped, tag = 'scoped memory for tpu_custom_call.1']
    #allocation4 [shape = 's32[1]{0}', space=sflag, size = 0x4, scoped, tag = 'scoped memory for tpu_custom_call.1']
    #allocation5 [shape = 'u8[12288]{0}', space=vmem, size = 0x3000, scoped, tag = 'input window, operand 3, single buffered']
    #allocation6 [shape = 's32[1]{0}', space=sflag, size = 0x4, scoped, tag = 'scoped memory for tpu_custom_call.1']
    #allocation7 [shape = 'u8[16384]{0}', space=vmem, size = 0x4000, scoped, tag = 'output window, operand 0, single buffered']
    %12 = vsyncpa [#allocation3], 0
    %13 = vsyncpa [#allocation6], 0
    %14 = vsyncpa [#allocation4], 0
    // Predicated region
    $region2: #{tpu_custom_call.1} parent=1 // pred_check
      _
    $region3: #{tpu_custom_call.1} parent=1 // pred_check_branch
      %16 = sbr.rel (0) target = $region5
    $region4: #{tpu_custom_call.1} parent=1 // pred_region
      %s18 = ssub.s32 512, 512
      %19 = vsyncadd [#allocation3], %s18
      %s20 = sshll.u32 [#allocation2], 4
      %s21 = int_to_ptr.vmem [resolvable:$true] %s20
      %26 = dma.hbm_to_vmem [thread:$0]  %s0, 512, %s21, [#allocation3], 128, 128, 8
    $region5: #{tpu_custom_call.1} parent=1 // pred_fallthru
      _
    // Predicated region
    $region6: #{tpu_custom_call.1} parent=1 // pred_check
      _
    $region7: #{tpu_custom_call.1} parent=1 // pred_check_branch
      %28 = sbr.rel (0) target = $region9
    $region8: #{tpu_custom_call.1} parent=1 // pred_region
      _
    $region9: #{tpu_custom_call.1} parent=1 // pred_fallthru
      _
    // Predicated region
    $region10: #{tpu_custom_call.1} parent=1 // pred_check
      _
    $region11: #{tpu_custom_call.1} parent=1 // pred_check_branch
      %30 = sbr.rel (0) target = $region13
    $region12: #{tpu_custom_call.1} parent=1 // pred_region
      _
    $region13: #{tpu_custom_call.1} parent=1 // pred_fallthru
      _
    // Predicated region
    $region14: #{tpu_custom_call.1} parent=1 // pred_check
      _
    $region15: #{tpu_custom_call.1} parent=1 // pred_check_branch
      %32 = sbr.rel (0) target = $region17
    $region16: #{tpu_custom_call.1} parent=1 // pred_region
      %s34 = ssub.s32 384, 384
      %35 = vsyncadd [#allocation6], %s34
      %s36 = sshll.u32 [#allocation5], 4
      %s37 = int_to_ptr.vmem [resolvable:$true] %s36
      %42 = dma.hbm_to_vmem [thread:$0]  %s3, 384, %s37, [#allocation6], 64, 64, 4
    $region17: #{tpu_custom_call.1} parent=1 // pred_fallthru
      _
    // Predicated region
    $region18: #{tpu_custom_call.1} parent=1 // pred_check
      _
    $region19: #{tpu_custom_call.1} parent=1 // pred_check_branch
      %44 = sbr.rel (0) target = $region21
    $region20: #{tpu_custom_call.1} parent=1 // pred_region
      _
    $region21: #{tpu_custom_call.1} parent=1 // pred_fallthru
      _
    // Predicated region
    $region22: #{tpu_custom_call.1} parent=1 // pred_check
      _
    $region23: #{tpu_custom_call.1} parent=1 // pred_check_branch
      %46 = sbr.rel (0) target = $region25
    $region24: #{tpu_custom_call.1} parent=1 // pred_region
      _
    $region25: #{tpu_custom_call.1} parent=1 // pred_fallthru
      _
    // Predicated region
    $region26: #{tpu_custom_call.1} parent=1 // pred_check
      _
    $region27: #{tpu_custom_call.1} parent=1 // pred_check_branch
      %48 = sbr.rel (0) target = $region29
    $region28: #{tpu_custom_call.1} parent=1 // pred_region
      _
    $region29: #{tpu_custom_call.1} parent=1 // pred_fallthru
      _
    // Predicated region
    $region30: #{tpu_custom_call.1} parent=1 // pred_check
      _
    $region31: #{tpu_custom_call.1} parent=1 // pred_check_branch
      %50 = sbr.rel (0) target = $region33
    $region32: #{tpu_custom_call.1} parent=1 // pred_region
      %51 = dma.done [#allocation3], 512
    $region33: #{tpu_custom_call.1} parent=1 // pred_fallthru
      _
    // Predicated region
    $region34: #{tpu_custom_call.1} parent=1 // pred_check
      _
    $region35: #{tpu_custom_call.1} parent=1 // pred_check_branch
      %53 = sbr.rel (0) target = $region37
    $region36: #{tpu_custom_call.1} parent=1 // pred_region
      %54 = dma.done [#allocation6], 384
    $region37: #{tpu_custom_call.1} parent=1 // pred_fallthru
      _
    %v56 = vld [vmem:[#allocation2] sm:$0xff]
    %v57 = vld [vmem:[#allocation2 + $0x8] sm:$0xff]
    %v58 = vld [vmem:[#allocation2 + $0x10] sm:$0xff]
    %v59 = vld [vmem:[#allocation2 + $0x18] sm:$0xff]
    %v60 = vld [vmem:[%s1] sm:$0x1]
    %v61 = vld [vmem:[%s2] sm:$0x1]
    %vm62 = vcmask 392192
    %v63 = vsel %vm62, %v56, 0.0
    %64 = vadd.xlane.f32.xlu0 %v63
    %v65 = vpop.xlane.xlu0 %64
    %v66 = vsel %vm62, %v57, 0.0
    %67 = vadd.xlane.f32.xlu0 %v66
    %v68 = vpop.xlane.xlu0 %67
    %v69 = vsel %vm62, %v58, 0.0
    %70 = vadd.xlane.f32.xlu0 %v69
    %v71 = vpop.xlane.xlu0 %70
    %v72 = vsel %vm62, %v59, 0.0
    %73 = vadd.xlane.f32.xlu0 %v72
    %v74 = vpop.xlane.xlu0 %73
    %v75 = vrcp.pop 48.0
    %v76 = vmul.f32 %v65, %v75
    %v77 = vmul.f32 %v68, %v75
    %v78 = vmul.f32 %v71, %v75
    %v79 = vmul.f32 %v74, %v75
    %v80 = vsub.f32 %v56, %v76
    %v81 = vsub.f32 %v57, %v77
    %v82 = vsub.f32 %v58, %v78
    %v83 = vsub.f32 %v59, %v79
    %v84 = vmul.f32 %v80, %v80
    %v85 = vmul.f32 %v81, %v81
    %v86 = vmul.f32 %v82, %v82
    %v87 = vmul.f32 %v83, %v83
    %v88 = vsel %vm62, %v84, 0.0
    %89 = vadd.xlane.f32.xlu0 %v88
    %v90 = vpop.xlane.xlu0 %89
    %v91 = vsel %vm62, %v85, 0.0
    %92 = vadd.xlane.f32.xlu0 %v91
    %v93 = vpop.xlane.xlu0 %92
    %v94 = vsel %vm62, %v86, 0.0
    %95 = vadd.xlane.f32.xlu0 %v94
    %v96 = vpop.xlane.xlu0 %95
    %v97 = vsel %vm62, %v87, 0.0
    %98 = vadd.xlane.f32.xlu0 %v97
    %v99 = vpop.xlane.xlu0 %98
    %v100 = vmul.f32 %v90, %v75
    %v101 = vmul.f32 %v93, %v75
    %v102 = vmul.f32 %v96, %v75
    %v103 = vmul.f32 %v99, %v75
    %v104 = vadd.f32 %v100, 1e-05
    %v105 = vadd.f32 %v101, 1e-05
    %v106 = vadd.f32 %v102, 1e-05
    %v107 = vadd.f32 %v103, 1e-05
    %v108 = vrsqrt.pop %v104
    %v109 = vrsqrt.pop %v105
    %v110 = vrsqrt.pop %v106
    %v111 = vrsqrt.pop %v107
    %v112 = vmul.f32 %v80, %v108
    %v113 = vmul.f32 %v81, %v109
    %v114 = vmul.f32 %v82, %v110
    %v115 = vmul.f32 %v83, %v111
    %v117 = vlaneseq
    %v118 = vshrl.u32 %v117, 7
    %v119 = vsub.s32 0, %v118
    %v120 = vrot.slane %v60, %v119
    %v122 = vmul.f32 %v112, %v120
    %v123 = vmul.f32 %v113, %v120
    %v124 = vmul.f32 %v114, %v120
    %v125 = vmul.f32 %v115, %v120
    %v127 = vlaneseq
    %v128 = vshrl.u32 %v127, 7
    %v129 = vsub.s32 0, %v128
    %v130 = vrot.slane %v61, %v129
    %v132 = vadd.f32 %v122, %v130
    %v133 = vadd.f32 %v123, %v130
    %v134 = vadd.f32 %v124, %v130
    %v135 = vadd.f32 %v125, %v130
    %v136 = vpack.c.bf16 %v133, %v132
    %v137 = vpack.c.bf16 %v135, %v134
    %v138 = vld [vmem:[#allocation5] sm:$0xf]
    %v139 = vld [vmem:[#allocation5 + $0x4] sm:$0xf]
    %v140 = vld [vmem:[#allocation5 + $0x8] sm:$0xf]
    %v141 = vld [vmem:[#allocation5 + $0xc] sm:$0xf]
    %v142 = vld [vmem:[#allocation5 + $0x10] sm:$0xf]
    %v143 = vld [vmem:[#allocation5 + $0x14] sm:$0xf]
    %v144 = vld [vmem:[%s4] sm:$0x1]
    %v146 = vlaneseq
    %v147 = vshrl.u32 %v146, 7
    %v148 = vsub.s32 0, %v147
    %v149 = vrot.slane %v144, %v148
    %v157 = vunpack.c.l.b16 %v138
    %v158 = vunpack.c.l.b16 %v139
    %v159 = vunpack.c.l.b16 %v140
    %v160 = vunpack.c.l.b16 %v141
    %v161 = vunpack.c.l.b16 %v142
    %v162 = vunpack.c.l.b16 %v143
    %v163 = vpack.c.b16 %v158, %v157
    %v164 = vpack.c.b16 %v160, %v159
    %v165 = vpack.c.b16 %v162, %v161
    %v170 = vsel %vm62, %v136, 0
    %v173 = vsel %vm62, %v137, 0
    %175 = vmatprep.subr.bf16.mxu0 0
    %176 = vmatpush1.bf16.msra.mxu0 %v163
    %177 = vmatprep.subr.bf16.mxu0 0
    %178 = vmatpush1.bf16.msra.mxu0 %v164
    %179 = vmatprep.subr.bf16.mxu0 0
    %180 = vmatpush1.bf16.msra.mxu0 %v165
    %181 = vmatprep.subr.bf16.mxu0 0
    %182 = vmatpush1.bf16.msra.mxu0 0
    %183 = vmatprep.subr.bf16.mxu0 0
    %184 = vmatpush1.bf16.msra.mxu0 0
    %185 = vmatprep.subr.bf16.mxu0 0
    %186 = vmatpush1.bf16.msra.mxu0 0
    %187 = vmatprep.subr.bf16.mxu0 0
    %188 = vmatpush1.bf16.msra.mxu0 0
    %189 = vmatprep.subr.bf16.mxu0 0
    %190 = vmatpush1.bf16.msra.mxu0 0
    %191 = vmatprep.subr.bf16.mxu0 0
    %192 = vmatpush1.bf16.msra.mxu0 0
    %193 = vmatprep.subr.bf16.mxu0 0
    %194 = vmatpush1.bf16.msra.mxu0 0
    %195 = vmatprep.subr.bf16.mxu0 0
    %196 = vmatpush1.bf16.msra.mxu0 0
    %197 = vmatprep.subr.bf16.mxu0 0
    %198 = vmatpush1.bf16.msra.mxu0 0
    %199 = vmatprep.subr.bf16.mxu0 0
    %200 = vmatpush1.bf16.msra.mxu0 0
    %201 = vmatprep.subr.bf16.mxu0 0
    %202 = vmatpush1.bf16.msra.mxu0 0
    %203 = vmatprep.subr.bf16.mxu0 0
    %204 = vmatpush1.bf16.msra.mxu0 0
    %205 = vmatprep.subr.bf16.mxu0 0
    %206 = vmatpush1.bf16.msra.mxu0 0
    %207 = vmatprep.mubr.bf16.mxu0 0
    %208 = vmatmul.mubr.bf16.gmra.mrb[0].mxu0 %v170
    %v209 = vpop.f32.mrb[0].mxu0
    %v210 = vadd.f32 %v149, %v209
    %v211 = vpop.f32.mrb[0].mxu0
    %v212 = vpop.f32.mrb[0].mxu0
    %v213 = vadd.f32 %v149, %v212
    %v214 = vpop.f32.mrb[0].mxu0
    %215 = vmatprep.mubr.bf16.mxu0 0
    %216 = vmatmul.mubr.bf16.gmra.mrb[0].mxu0 %v173
    %v217 = vpop.f32.mrb[0].mxu0
    %v218 = vadd.f32 %v149, %v217
    %v219 = vpop.f32.mrb[0].mxu0
    %v220 = vpop.f32.mrb[0].mxu0
    %v221 = vadd.f32 %v149, %v220
    %v222 = vpop.f32.mrb[0].mxu0
    %223 = vdwg.mxu0
    %v224 = vld [vmem:[%s5] sm:$0x1]
    %v225 = vld [vmem:[%s6] sm:$0x1]
    %226 = vadd.xlane.f32.xlu0 %v210
    %v227 = vpop.xlane.xlu0 %226
    %228 = vadd.xlane.f32.xlu0 %v213
    %v229 = vpop.xlane.xlu0 %228
    %230 = vadd.xlane.f32.xlu0 %v218
    %v231 = vpop.xlane.xlu0 %230
    %232 = vadd.xlane.f32.xlu0 %v221
    %v233 = vpop.xlane.xlu0 %232
    %v234 = vrcp.pop 128.0
    %v235 = vmul.f32 %v227, %v234
    %v236 = vmul.f32 %v229, %v234
    %v237 = vmul.f32 %v231, %v234
    %v238 = vmul.f32 %v233, %v234
    %v239 = vsub.f32 %v210, %v235
    %v240 = vsub.f32 %v213, %v236
    %v241 = vsub.f32 %v218, %v237
    %v242 = vsub.f32 %v221, %v238
    %v243 = vmul.f32 %v239, %v239
    %v244 = vmul.f32 %v240, %v240
    %v245 = vmul.f32 %v241, %v241
    %v246 = vmul.f32 %v242, %v242
    %247 = vadd.xlane.f32.xlu0 %v243
    %v248 = vpop.xlane.xlu0 %247
    %249 = vadd.xlane.f32.xlu0 %v244
    %v250 = vpop.xlane.xlu0 %249
    %251 = vadd.xlane.f32.xlu0 %v245
    %v252 = vpop.xlane.xlu0 %251
    %253 = vadd.xlane.f32.xlu0 %v246
    %v254 = vpop.xlane.xlu0 %253
    %v255 = vmul.f32 %v248, %v234
    %v256 = vmul.f32 %v250, %v234
    %v257 = vmul.f32 %v252, %v234
    %v258 = vmul.f32 %v254, %v234
    %v259 = vadd.f32 %v255, 1e-05
    %v260 = vadd.f32 %v256, 1e-05
    %v261 = vadd.f32 %v257, 1e-05
    %v262 = vadd.f32 %v258, 1e-05
    %v263 = vrsqrt.pop %v259
    %v264 = vrsqrt.pop %v260
    %v265 = vrsqrt.pop %v261
    %v266 = vrsqrt.pop %v262
    %v267 = vmul.f32 %v239, %v263
    %v268 = vmul.f32 %v240, %v264
    %v269 = vmul.f32 %v241, %v265
    %v270 = vmul.f32 %v242, %v266
    %v272 = vlaneseq
    %v273 = vshrl.u32 %v272, 7
    %v274 = vsub.s32 0, %v273
    %v275 = vrot.slane %v224, %v274
    %v277 = vmul.f32 %v267, %v275
    %v278 = vmul.f32 %v268, %v275
    %v279 = vmul.f32 %v269, %v275
    %v280 = vmul.f32 %v270, %v275
    %v282 = vlaneseq
    %v283 = vshrl.u32 %v282, 7
    %v284 = vsub.s32 0, %v283
    %v285 = vrot.slane %v225, %v284
    %v287 = vadd.f32 %v277, %v285
    %v288 = vadd.f32 %v278, %v285
    %v289 = vadd.f32 %v279, %v285
    %v290 = vadd.f32 %v280, %v285
    %291 = vst [vmem:[#allocation7] sm:$0xff] %v287
    %292 = vst [vmem:[#allocation7 + $0x8] sm:$0xff] %v288
    %293 = vst [vmem:[#allocation7 + $0x10] sm:$0xff] %v289
    %294 = vst [vmem:[#allocation7 + $0x18] sm:$0xff] %v290
    // Predicated region
    $region38: #{tpu_custom_call.1} parent=1 // pred_check
      _
    $region39: #{tpu_custom_call.1} parent=1 // pred_check_branch
      %296 = sbr.rel (0) target = $region41
    $region40: #{tpu_custom_call.1} parent=1 // pred_region
      %s298 = ssub.s32 512, 512
      %299 = vsyncadd [#allocation4], %s298
      %s300 = sshll.u32 [#allocation7], 4
      %s301 = int_to_ptr.vmem [resolvable:$true] %s300
      %306 = dma.vmem_to_hbm [thread:$0]  %s301, 512, %s7, [#allocation4], 128, 128, 8
    $region41: #{tpu_custom_call.1} parent=1 // pred_fallthru
      _
    // Predicated region
    $region42: #{tpu_custom_call.1} parent=1 // pred_check
      _
    $region43: #{tpu_custom_call.1} parent=1 // pred_check_branch
      %308 = sbr.rel (0) target = $region45
    $region44: #{tpu_custom_call.1} parent=1 // pred_region
      %309 = dma.done [#allocation4], 512
    $region45: #{tpu_custom_call.1} parent=1 // pred_fallthru
      _
    %310 = vsyncpa [#allocation3], 1
    %311 = vsyncpa [#allocation6], 1
    %312 = vsyncpa [#allocation4], 1

</llo_original>
